<compile_context>
chip_gen: v7x
topology: tpu7x:2x2x1
jax: 0.10.0
libtpu: 0.0.40
codegen_flags: <defaults>
</compile_context>

<pallas_src>
import functools

import jax
import jax.numpy as jnp
from jax.experimental import pallas as pl
from jax.experimental.pallas import tpu as pltpu


def _channel_atten_kernel(x_ref, w1_ref, w2_ref, o_ref, *, nb, c, hw):
    # x_ref/o_ref: (nb*C, hw)  -- nb batches of C channel rows, spatial flattened
    # w1_ref     : (Ch, C)     -- Conv2d(C, Ch, 1, bias=False) weight
    # w2_ref     : (C, Ch)     -- Conv2d(Ch, C, 1, bias=False) weight
    x = x_ref[...]                                               # (nb*C, hw), native dtype

    # Spatial pooling on densely packed sublanes: one lane reduction per row.
    # Sum accumulates in f32; 1/hw is a static constant (cheap VPU multiply).
    avg = jnp.sum(x.astype(jnp.float32), axis=-1, keepdims=True) * jnp.float32(1.0 / hw)
    mx = jnp.max(x, axis=-1, keepdims=True).astype(jnp.float32)  # (nb*C, 1)

    # Stack per-batch pooled vectors as columns of one (C, 2*nb) matrix so the
    # shared MLP is a single matmul -> ReLU -> matmul pass per block.
    cols = [avg[b * c:(b + 1) * c, :] for b in range(nb)]
    cols += [mx[b * c:(b + 1) * c, :] for b in range(nb)]
    p = jnp.concatenate(cols, axis=1)                            # (C, 2*nb), f32

    w1 = w1_ref[...].astype(jnp.float32)                         # (Ch, C)
    w2 = w2_ref[...].astype(jnp.float32)                         # (C, Ch)
    h = jnp.maximum(jnp.dot(w1, p, preferred_element_type=jnp.float32), 0.0)  # (Ch, 2*nb)
    y = jnp.dot(w2, h, preferred_element_type=jnp.float32)       # (C, 2*nb)
    sig = jax.nn.sigmoid(y[:, :nb] + y[:, nb:])                  # (C, nb), f32

    # Apply the per-(batch, channel) gate. Multiply in the input dtype (keeps
    # bf16 vregs packed on v6e/v7x); the lane (last) dim stays dense (= hw).
    for b in range(nb):
        rows = slice(b * c, (b + 1) * c)
        o_ref[rows, :] = x[rows, :] * sig[:, b:b + 1].astype(x.dtype)


def _choose_batches_per_block(n, c, hw, itemsize):
    """Pick Nb (batches per block) so that Nb*C rows pack sublanes and the
    (Nb*C, hw) block is ~<=2 MiB, preferring >=2 grid steps (v7x has 2 TCs)."""
    sub = {4: 8, 2: 16, 1: 32}.get(itemsize, 8)
    budget = 2 << 20          # target x-block bytes (native dtype)
    nb_max = 32               # bounds the unrolled per-batch gate code
    per_batch = c * hw * itemsize
    divisors = [d for d in range(1, n + 1) if n % d == 0]
    valid = [d for d in divisors if (d * c) % sub == 0 or d == n]  # full dim is exempt
    fitting = [d for d in valid if d <= nb_max and d * per_batch <= budget]
    if fitting:
        multi = [d for d in fitting if n // d >= 2]   # keep both v7x TCs busy when possible
        return max(multi) if multi else max(fitting)
    # Nothing fits the budget: take the smallest legal block and rely on the
    # raised VMEM limit (see two-phase TODO at top of file for the huge case).
    return min(valid)


def channel_atten(x_nchw, w1, w2, *, donate_x=False):
    """x_nchw: (N, C, H, W); w1: (Ch, C, 1, 1); w2: (C, Ch, 1, 1).

    Set donate_x=True only if the caller does not reuse x (otherwise XLA will
    insert a defensive copy and the alias buys nothing)."""
    N, C, H, W = x_nchw.shape
    Ch = w1.shape[0]
    hw = H * W
    itemsize = jnp.dtype(x_nchw.dtype).itemsize

    nb = _choose_batches_per_block(N, C, hw, itemsize)
    tm = nb * C
    grid = (N // nb,)

    x2 = x_nchw.reshape(N * C, hw)       # metadata-only reshape: no extra HBM pass
    w1m = w1.reshape(Ch, C)              # natural layouts, no transposes anywhere
    w2m = w2.reshape(C, Ch)

    # VMEM: in + out double-buffered (4x) + one block of slack for in-kernel
    # temporaries + the f32 cast used by the sum reduction for sub-f32 inputs.
    block_bytes = tm * hw * itemsize
    f32_temp = tm * hw * 4 if itemsize != 4 else 0
    vmem_needed = 5 * block_bytes + f32_temp + 4 * Ch * C * itemsize + (2 << 20)
    try:
        phys_vmem = int(pltpu.get_tpu_info().vmem_capacity_bytes)
    except Exception:
        phys_vmem = 64 << 20             # conservative (v7x per-TensorCore)
    cap = max((phys_vmem * 3) // 4, 16 << 20)
    vmem_limit = int(min(max(vmem_needed, 32 << 20), cap))

    kernel = functools.partial(_channel_atten_kernel, nb=nb, c=C, hw=hw)

    out2 = pl.pallas_call(
        kernel,
        out_shape=jax.ShapeDtypeStruct((N * C, hw), x_nchw.dtype),
        grid=grid,
        in_specs=[
            pl.BlockSpec((tm, hw), lambda i: (i, 0)),
            pl.BlockSpec((Ch, C), lambda i: (0, 0)),   # tiny weights stay resident
            pl.BlockSpec((C, Ch), lambda i: (0, 0)),
        ],
        out_specs=pl.BlockSpec((tm, hw), lambda i: (i, 0)),
        compiler_params=pltpu.CompilerParams(
            dimension_semantics=("parallel",),
            vmem_limit_bytes=vmem_limit,
        ),
        input_output_aliases={0: 0} if donate_x else {},
    )(x2, w1m, w2m)

    return out2.reshape(N, C, H, W)


def channel_atten_ref(x_nchw, w1, w2):
    """Pure-JAX reference matching the PyTorch forward pass."""
    N, C, H, W = x_nchw.shape
    Ch = w1.shape[0]
    x = x_nchw.astype(jnp.float32)
    avg = jnp.mean(x, axis=(2, 3))            # (N, C)  AdaptiveAvgPool2d(1)
    mx = jnp.max(x, axis=(2, 3))              # (N, C)  AdaptiveMaxPool2d(1)
    w1m = w1.reshape(Ch, C).astype(jnp.float32)
    w2m = w2.reshape(C, Ch).astype(jnp.float32)

    def mlp(p):
        h = jnp.maximum(p @ w1m.T, 0.0)
        return h @ w2m.T

    sig = jax.nn.sigmoid(mlp(avg) + mlp(mx))  # (N, C)
    return (x * sig[:, :, None, None]).astype(x_nchw.dtype)


if __name__ == "__main__":
    def run_case(N, C, H, W, ratio, key):
        Ch = C // ratio
        kx, k1, k2 = jax.random.split(key, 3)
        x = jax.random.normal(kx, (N, C, H, W), dtype=jnp.float32)
        # Conv2d(C, Ch, 1, bias=False): (Ch, C, 1, 1); Conv2d(Ch, C, 1): (C, Ch, 1, 1)
        w1 = 0.1 * jax.random.normal(k1, (Ch, C, 1, 1), dtype=jnp.float32)
        w2 = 0.1 * jax.random.normal(k2, (C, Ch, 1, 1), dtype=jnp.float32)
        out = jax.block_until_ready(channel_atten(x, w1, w2))
        ref = channel_atten_ref(x, w1, w2)
        assert out.shape == (N, C, H, W)
        assert jnp.allclose(out, ref, atol=1e-5, rtol=1e-5), "mismatch vs reference"

    key = jax.random.PRNGKey(0)
    k0, k1 = jax.random.split(key)
    # Note: the module's default __init__ (in_channels=2, ratio=16) would give a
    # zero-width hidden layer, so use C=4, ratio=2 -> Ch=2.
    run_case(2, 4, 16, 16, 2, k0)   # single-block grid, C < 8 (packed sublanes)
    run_case(4, 4, 8, 8, 2, k1)     # multi-step "parallel" grid (2 blocks)
    print("KERNEL_OK")
</pallas_src>

<mosaic_0001>
module attributes {stable_mosaic.version = 11 : i64} {
  func.func @_channel_atten_kernel(%arg0: i32, %arg1: memref<8x256xf32, #tpu.memory_space<vmem>>, %arg2: memref<2x4xf32, #tpu.memory_space<vmem>>, %arg3: memref<4x2xf32, #tpu.memory_space<vmem>>, %arg4: memref<8x256xf32, #tpu.memory_space<vmem>>) attributes {dimension_semantics = [#tpu.dimension_semantics<parallel>], iteration_bounds = array<i64: 1>, scalar_prefetch = 0 : i64, scratch_operands = 0 : i64, tpu.core_type = #tpu.core_type<tc>, window_params = [{transform_indices = @transform_0, window_bounds = array<i64: 8, 256>}, {pipeline_mode = #tpu.pipeline_mode<synchronous>, transform_indices = @transform_1, window_bounds = array<i64: 2, 4>}, {pipeline_mode = #tpu.pipeline_mode<synchronous>, transform_indices = @transform_2, window_bounds = array<i64: 4, 2>}, {transform_indices = @transform_3, window_bounds = array<i64: 8, 256>}]} {
    %c0 = arith.constant 0 : index
    %c0_0 = arith.constant 0 : index
    %0 = vector.load %arg1[%c0, %c0_0] : memref<8x256xf32, #tpu.memory_space<vmem>>, vector<8x256xf32>
    %cst = arith.constant dense<0.000000e+00> : vector<8xf32>
    %1 = vector.multi_reduction <add>, %0, %cst [1] : vector<8x256xf32> to vector<8xf32>
    %2 = vector.shape_cast %1 : vector<8xf32> to vector<8x1xf32>
    %cst_1 = arith.constant 3.906250e-03 : f32
    %3 = vector.broadcast %cst_1 : f32 to vector<8x1xf32>
    %4 = arith.mulf %2, %3 : vector<8x1xf32>
    %cst_2 = arith.constant dense<0xFF800000> : vector<8xf32>
    %5 = vector.multi_reduction <maximumf>, %0, %cst_2 [1] : vector<8x256xf32> to vector<8xf32>
    %6 = vector.shape_cast %5 : vector<8xf32> to vector<8x1xf32>
    %7 = vector.extract_strided_slice %4 {offsets = [0, 0], sizes = [4, 1], strides = [1, 1]} : vector<8x1xf32> to vector<4x1xf32>
    %8 = vector.extract_strided_slice %4 {offsets = [4, 0], sizes = [4, 1], strides = [1, 1]} : vector<8x1xf32> to vector<4x1xf32>
    %9 = vector.extract_strided_slice %6 {offsets = [0, 0], sizes = [4, 1], strides = [1, 1]} : vector<8x1xf32> to vector<4x1xf32>
    %10 = vector.extract_strided_slice %6 {offsets = [4, 0], sizes = [4, 1], strides = [1, 1]} : vector<8x1xf32> to vector<4x1xf32>
    %11 = tpu.concatenate %7, %8, %9, %10 in 1 : vector<4x1xf32>, vector<4x1xf32>, vector<4x1xf32>, vector<4x1xf32> -> vector<4x4xf32>
    %c0_3 = arith.constant 0 : index
    %c0_4 = arith.constant 0 : index
    %12 = vector.load %arg2[%c0_3, %c0_4] : memref<2x4xf32, #tpu.memory_space<vmem>>, vector<2x4xf32>
    %c0_5 = arith.constant 0 : index
    %c0_6 = arith.constant 0 : index
    %13 = vector.load %arg3[%c0_5, %c0_6] : memref<4x2xf32, #tpu.memory_space<vmem>>, vector<4x2xf32>
    %cst_7 = arith.constant dense<0.000000e+00> : vector<2x4xf32>
    %14 = tpu.matmul %12, %11, %cst_7 {dimension_numbers = #tpu.dot_dimension_numbers<[1], [0], [0], [1], [0, 0, 1, 1], [], []>} : vector<2x4xf32>, vector<4x4xf32>, vector<2x4xf32> -> vector<2x4xf32>
    %cst_8 = arith.constant 0.000000e+00 : f32
    %15 = vector.broadcast %cst_8 : f32 to vector<2x4xf32>
    %16 = arith.maximumf %14, %15 : vector<2x4xf32>
    %cst_9 = arith.constant dense<0.000000e+00> : vector<4x4xf32>
    %17 = tpu.matmul %13, %16, %cst_9 {dimension_numbers = #tpu.dot_dimension_numbers<[1], [0], [0], [1], [0, 0, 1, 1], [], []>} : vector<4x2xf32>, vector<2x4xf32>, vector<4x4xf32> -> vector<4x4xf32>
    %18 = vector.extract_strided_slice %17 {offsets = [0, 0], sizes = [4, 2], strides = [1, 1]} : vector<4x4xf32> to vector<4x2xf32>
    %19 = vector.extract_strided_slice %17 {offsets = [0, 2], sizes = [4, 2], strides = [1, 1]} : vector<4x4xf32> to vector<4x2xf32>
    %20 = arith.addf %18, %19 : vector<4x2xf32>
    %21 = arith.negf %20 : vector<4x2xf32>
    %22 = math.exp %21 : vector<4x2xf32>
    %cst_10 = arith.constant 1.000000e+00 : f32
    %23 = vector.broadcast %cst_10 : f32 to vector<4x2xf32>
    %24 = arith.addf %23, %22 : vector<4x2xf32>
    %25 = arith.divf %23, %24 : vector<4x2xf32>
    %26 = vector.extract_strided_slice %0 {offsets = [0, 0], sizes = [4, 256], strides = [1, 1]} : vector<8x256xf32> to vector<4x256xf32>
    %27 = vector.extract_strided_slice %25 {offsets = [0, 0], sizes = [4, 1], strides = [1, 1]} : vector<4x2xf32> to vector<4x1xf32>
    %28 = vector.broadcast %27 : vector<4x1xf32> to vector<4x256xf32>
    %29 = arith.mulf %26, %28 : vector<4x256xf32>
    %c0_11 = arith.constant 0 : index
    %c0_12 = arith.constant 0 : index
    %30 = vector.load %arg4[%c0_11, %c0_12] : memref<8x256xf32, #tpu.memory_space<vmem>>, vector<4x256xf32>
    tpu.vector_store %arg4[%c0_11, %c0_12], %29 {strides = array<i32>} : memref<8x256xf32, #tpu.memory_space<vmem>>, vector<4x256xf32>,
    %31 = vector.extract_strided_slice %0 {offsets = [4, 0], sizes = [4, 256], strides = [1, 1]} : vector<8x256xf32> to vector<4x256xf32>
    %32 = vector.extract_strided_slice %25 {offsets = [0, 1], sizes = [4, 1], strides = [1, 1]} : vector<4x2xf32> to vector<4x1xf32>
    %33 = vector.broadcast %32 : vector<4x1xf32> to vector<4x256xf32>
    %34 = arith.mulf %31, %33 : vector<4x256xf32>
    %c4 = arith.constant 4 : index
    %c0_13 = arith.constant 0 : index
    %35 = vector.load %arg4[%c4, %c0_13] : memref<8x256xf32, #tpu.memory_space<vmem>>, vector<4x256xf32>
    tpu.vector_store %arg4[%c4, %c0_13], %34 {strides = array<i32>} : memref<8x256xf32, #tpu.memory_space<vmem>>, vector<4x256xf32>,
    return
  }
  func.func @transform_0(%arg0: i32) -> (i32, i32) {
    %c0_i32 = arith.constant 0 : i32
    %c0_i32_0 = arith.constant 0 : i32
    return %arg0, %c0_i32 : i32, i32
  }
  func.func @transform_1(%arg0: i32) -> (i32, i32) {
    %c0_i32 = arith.constant 0 : i32
    %c0_i32_0 = arith.constant 0 : i32
    %c0_i32_1 = arith.constant 0 : i32
    return %c0_i32, %c0_i32_0 : i32, i32
  }
  func.func @transform_2(%arg0: i32) -> (i32, i32) {
    %c0_i32 = arith.constant 0 : i32
    %c0_i32_0 = arith.constant 0 : i32
    %c0_i32_1 = arith.constant 0 : i32
    return %c0_i32, %c0_i32_0 : i32, i32
  }
  func.func @transform_3(%arg0: i32) -> (i32, i32) {
    %c0_i32 = arith.constant 0 : i32
    %c0_i32_0 = arith.constant 0 : i32
    return %arg0, %c0_i32 : i32, i32
  }
}

</mosaic_0001>

<llo_original>
// kernel: tpu_custom_call.1
$region0: #{tpu_custom_call.1}
  #allocation0 [shape = 'u32[]', space=smem, size = 0x4, offset = 0x4, fixed_abs, tag = 'smem constant byte address 0x4 - core index']
  #allocation1 [shape = 'u32[144,128]{1,0:T(1,128)}', space=vmem, size = 0x12000, scoped, tag = 'internal scratch']
  %s0 = inlined_call_operand.hbm [shape: f32[8,256], index: 0, kind: input, shape index: {}]
  %s1 = inlined_call_operand.vmem [shape: f32[2,4], index: 1, kind: input, shape index: {}]
  %s2 = inlined_call_operand.vmem [shape: f32[4,2], index: 2, kind: input, shape index: {}]
  %s3 = inlined_call_operand.hbm [shape: f32[8,256], index: 3, kind: output, shape index: {}]
  %s4 = sld [smem:[#allocation0]]
  $region26: #{tpu_custom_call.1} parent=0
    _
  %s6 = ssub.s32 1, %s4
  %s7 = scalar_select 0, %s6, %s4
  $region1: #{tpu_custom_call.1} parent=0
    #allocation2 [shape = 'u8[8192]{0}', space=vmem, size = 0x2000, scoped, tag = 'input window, operand 0, single buffered']
    #allocation3 [shape = 's32[1]{0}', space=sflag, size = 0x4, scoped, tag = 'scoped memory for tpu_custom_call.1']
    #allocation4 [shape = 's32[1]{0}', space=sflag, size = 0x4, scoped, tag = 'scoped memory for tpu_custom_call.1']
    #allocation5 [shape = 'u8[8192]{0}', space=vmem, size = 0x2000, scoped, tag = 'output window, operand 0, single buffered']
    %8 = vsyncpa [#allocation3], 0
    %9 = vsyncpa [#allocation4], 0
    // Predicated region
    $region2: #{tpu_custom_call.1} parent=1 // pred_check
      _
    $region3: #{tpu_custom_call.1} parent=1 // pred_check_branch
      %11 = sbr.rel (0) target = $region5
    $region4: #{tpu_custom_call.1} parent=1 // pred_region
      %s13 = ssub.s32 256, 256
      %14 = vsyncadd [#allocation3], %s13
      %s16 = sshll.u32 [#allocation2], 4
      %s17 = int_to_ptr.vmem [resolvable:$true] %s16
      %19 = dma.hbm_to_vmem [thread:$0]  %s0, 256, %s17, [#allocation3]
    $region5: #{tpu_custom_call.1} parent=1 // pred_fallthru
      _
    // Predicated region
    $region6: #{tpu_custom_call.1} parent=1 // pred_check
      _
    $region7: #{tpu_custom_call.1} parent=1 // pred_check_branch
      %21 = sbr.rel (0) target = $region9
    $region8: #{tpu_custom_call.1} parent=1 // pred_region
      _
    $region9: #{tpu_custom_call.1} parent=1 // pred_fallthru
      _
    // Predicated region
    $region10: #{tpu_custom_call.1} parent=1 // pred_check
      _
    $region11: #{tpu_custom_call.1} parent=1 // pred_check_branch
      %23 = sbr.rel (0) target = $region13
    $region12: #{tpu_custom_call.1} parent=1 // pred_region
      _
    $region13: #{tpu_custom_call.1} parent=1 // pred_fallthru
      _
    // Predicated region
    $region14: #{tpu_custom_call.1} parent=1 // pred_check
      _
    $region15: #{tpu_custom_call.1} parent=1 // pred_check_branch
      %25 = sbr.rel (0) target = $region17
    $region16: #{tpu_custom_call.1} parent=1 // pred_region
      %26 = dma.done [#allocation3], 256
    $region17: #{tpu_custom_call.1} parent=1 // pred_fallthru
      _
    %v27 = vld [vmem:[#allocation2] sm:$0xff]
    %v28 = vld [vmem:[#allocation2 + $0x8] sm:$0xff]
    %v29 = vadd.f32 %v27, %v28
    %30 = vadd.xlane.f32.xlu0 %v29
    %v31 = vpop.xlane.xlu0 %30
    %v32 = vmul.f32 %v31, 0.00390625
    %v33 = vmax.f32 %v27, %v28
    %34 = vmax.xlane.f32.xlu0 %v33
    %v35 = vpop.xlane.xlu0 %34
    %v37 = vrot.slane %v32, 4
    %v40 = vrot.slane %v35, 4
    %vm42 = vcmask 7168
    %v43 = vsel %vm42, %v32, %v37
    %vm44 = vcmask 15360
    %v45 = vsel %vm44, %v43, %v35
    %vm46 = vcmask 23552
    %v47 = vsel %vm46, %v45, %v40
    %v48 = vld [vmem:[%s1] sm:$0x3]
    %v49 = vld [vmem:[%s2] sm:$0xf]
    %vm50 = vcmask 31744
    %v52 = vsel %vm50, %v48, 0
    %vm54 = vcmask 1043456
    %v56 = vsel %vm54, %v47, 0
    %58 = vmatprep.subr.mxu0 0.0
    %59 = vmatpush1.msra.mxu0 %v56
    %60 = vmatprep.subr.mxu0 0.0
    %61 = vmatpush1.msra.mxu0 0.0
    %62 = vmatprep.subr.mxu0 0.0
    %63 = vmatpush1.msra.mxu0 0.0
    %64 = vmatprep.subr.mxu0 0.0
    %65 = vmatpush1.msra.mxu0 0.0
    %66 = vmatprep.subr.mxu0 0.0
    %67 = vmatpush1.msra.mxu0 0.0
    %68 = vmatprep.subr.mxu0 0.0
    %69 = vmatpush1.msra.mxu0 0.0
    %70 = vmatprep.subr.mxu0 0.0
    %71 = vmatpush1.msra.mxu0 0.0
    %72 = vmatprep.subr.mxu0 0.0
    %73 = vmatpush1.msra.mxu0 0.0
    %74 = vmatprep.subr.mxu0 0.0
    %75 = vmatpush1.msra.mxu0 0.0
    %76 = vmatprep.subr.mxu0 0.0
    %77 = vmatpush1.msra.mxu0 0.0
    %78 = vmatprep.subr.mxu0 0.0
    %79 = vmatpush1.msra.mxu0 0.0
    %80 = vmatprep.subr.mxu0 0.0
    %81 = vmatpush1.msra.mxu0 0.0
    %82 = vmatprep.subr.mxu0 0.0
    %83 = vmatpush1.msra.mxu0 0.0
    %84 = vmatprep.subr.mxu0 0.0
    %85 = vmatpush1.msra.mxu0 0.0
    %86 = vmatprep.subr.mxu0 0.0
    %87 = vmatpush1.msra.mxu0 0.0
    %88 = vmatprep.subr.mxu0 0.0
    %89 = vmatpush1.msra.mxu0 0.0
    %90 = vmatprep.subr.mxu0 0.0
    %91 = vmatpush1.msra.mxu0 0.0
    %92 = vmatprep.subr.mxu0 0.0
    %93 = vmatpush1.msra.mxu0 0.0
    %94 = vmatprep.subr.mxu0 0.0
    %95 = vmatpush1.msra.mxu0 0.0
    %96 = vmatprep.subr.mxu0 0.0
    %97 = vmatpush1.msra.mxu0 0.0
    %98 = vmatprep.subr.mxu0 0.0
    %99 = vmatpush1.msra.mxu0 0.0
    %100 = vmatprep.subr.mxu0 0.0
    %101 = vmatpush1.msra.mxu0 0.0
    %102 = vmatprep.subr.mxu0 0.0
    %103 = vmatpush1.msra.mxu0 0.0
    %104 = vmatprep.subr.mxu0 0.0
    %105 = vmatpush1.msra.mxu0 0.0
    %106 = vmatprep.subr.mxu0 0.0
    %107 = vmatpush1.msra.mxu0 0.0
    %108 = vmatprep.subr.mxu0 0.0
    %109 = vmatpush1.msra.mxu0 0.0
    %110 = vmatprep.subr.mxu0 0.0
    %111 = vmatpush1.msra.mxu0 0.0
    %112 = vmatprep.subr.mxu0 0.0
    %113 = vmatpush1.msra.mxu0 0.0
    %114 = vmatprep.subr.mxu0 0.0
    %115 = vmatpush1.msra.mxu0 0.0
    %116 = vmatprep.subr.mxu0 0.0
    %117 = vmatpush1.msra.mxu0 0.0
    %118 = vmatprep.subr.mxu0 0.0
    %119 = vmatpush1.msra.mxu0 0.0
    %120 = vmatprep.subr.mxu0 0.0
    %121 = vmatpush1.msra.mxu0 0.0
    %122 = vmatprep.mubr.f32.mxu0 0.0
    %123 = vmatmul.mubr.f32.gmra.mrb[0].mxu0 %v52
    %v124 = vpop.f32.mrb[0].mxu0
    %v125 = vadd.f32 0.0, %v124
    %v126 = vpop.f32.mrb[0].mxu0
    %127 = vdwg.mxu0
    %v128 = vmax.f32 %v125, 0.0
    %v130 = vsel %vm44, %v49, 0
    %vm132 = vcmask 1041408
    %v134 = vsel %vm132, %v128, 0
    %136 = vmatprep.subr.mxu0 0.0
    %137 = vmatpush1.msra.mxu0 %v134
    %138 = vmatprep.subr.mxu0 0.0
    %139 = vmatpush1.msra.mxu0 0.0
    %140 = vmatprep.subr.mxu0 0.0
    %141 = vmatpush1.msra.mxu0 0.0
    %142 = vmatprep.subr.mxu0 0.0
    %143 = vmatpush1.msra.mxu0 0.0
    %144 = vmatprep.subr.mxu0 0.0
    %145 = vmatpush1.msra.mxu0 0.0
    %146 = vmatprep.subr.mxu0 0.0
    %147 = vmatpush1.msra.mxu0 0.0
    %148 = vmatprep.subr.mxu0 0.0
    %149 = vmatpush1.msra.mxu0 0.0
    %150 = vmatprep.subr.mxu0 0.0
    %151 = vmatpush1.msra.mxu0 0.0
    %152 = vmatprep.subr.mxu0 0.0
    %153 = vmatpush1.msra.mxu0 0.0
    %154 = vmatprep.subr.mxu0 0.0
    %155 = vmatpush1.msra.mxu0 0.0
    %156 = vmatprep.subr.mxu0 0.0
    %157 = vmatpush1.msra.mxu0 0.0
    %158 = vmatprep.subr.mxu0 0.0
    %159 = vmatpush1.msra.mxu0 0.0
    %160 = vmatprep.subr.mxu0 0.0
    %161 = vmatpush1.msra.mxu0 0.0
    %162 = vmatprep.subr.mxu0 0.0
    %163 = vmatpush1.msra.mxu0 0.0
    %164 = vmatprep.subr.mxu0 0.0
    %165 = vmatpush1.msra.mxu0 0.0
    %166 = vmatprep.subr.mxu0 0.0
    %167 = vmatpush1.msra.mxu0 0.0
    %168 = vmatprep.subr.mxu0 0.0
    %169 = vmatpush1.msra.mxu0 0.0
    %170 = vmatprep.subr.mxu0 0.0
    %171 = vmatpush1.msra.mxu0 0.0
    %172 = vmatprep.subr.mxu0 0.0
    %173 = vmatpush1.msra.mxu0 0.0
    %174 = vmatprep.subr.mxu0 0.0
    %175 = vmatpush1.msra.mxu0 0.0
    %176 = vmatprep.subr.mxu0 0.0
    %177 = vmatpush1.msra.mxu0 0.0
    %178 = vmatprep.subr.mxu0 0.0
    %179 = vmatpush1.msra.mxu0 0.0
    %180 = vmatprep.subr.mxu0 0.0
    %181 = vmatpush1.msra.mxu0 0.0
    %182 = vmatprep.subr.mxu0 0.0
    %183 = vmatpush1.msra.mxu0 0.0
    %184 = vmatprep.subr.mxu0 0.0
    %185 = vmatpush1.msra.mxu0 0.0
    %186 = vmatprep.subr.mxu0 0.0
    %187 = vmatpush1.msra.mxu0 0.0
    %188 = vmatprep.subr.mxu0 0.0
    %189 = vmatpush1.msra.mxu0 0.0
    %190 = vmatprep.subr.mxu0 0.0
    %191 = vmatpush1.msra.mxu0 0.0
    %192 = vmatprep.subr.mxu0 0.0
    %193 = vmatpush1.msra.mxu0 0.0
    %194 = vmatprep.subr.mxu0 0.0
    %195 = vmatpush1.msra.mxu0 0.0
    %196 = vmatprep.subr.mxu0 0.0
    %197 = vmatpush1.msra.mxu0 0.0
    %198 = vmatprep.subr.mxu0 0.0
    %199 = vmatpush1.msra.mxu0 0.0
    %200 = vmatprep.mubr.f32.mxu0 0.0
    %201 = vmatmul.mubr.f32.gmra.mrb[0].mxu0 %v130
    %v202 = vpop.f32.mrb[0].mxu0
    %v203 = vadd.f32 0.0, %v202
    %v204 = vpop.f32.mrb[0].mxu0
    %205 = vdwg.mxu0
    %207 = vrot.lane.b32.xlu0 %v203, 126
    %v208 = vpop.permute.xlu0 %207
    %v210 = vadd.f32 %v203, %v208
    %v211 = vxor.u32 %v210, 2147483648
    %v212 = vmul.f32 %v211, 1.442695
    %v213 = vpow.pop %v212
    %v214 = vadd.f32 %v213, 1.0
    %v215 = vrcp.pop %v214
    %v216 = vmul.f32 1.0, %v215
    %218 = vset.pattern.permute.xlu0 0
    %219 = vperm.xlu0 %218, %v216
    %v220 = vpop.permute.xlu0 %219
    %v222 = vmul.f32 %v27, %v220
    %v223 = vmul.f32 %v28, %v220
    %224 = vst [vmem:[#allocation5] sm:$0xf] %v222
    %225 = vst [vmem:[#allocation5 + $0x8] sm:$0xf] %v223
    %226 = vset.pattern.permute.xlu0 1
    %227 = vperm.xlu0 %226, %v216
    %v228 = vpop.permute.xlu0 %227
    %v229 = vrot.slane %v228, 4
    %v231 = vmul.f32 %v27, %v229
    %v232 = vmul.f32 %v28, %v229
    %233 = vst [vmem:[#allocation5] sm:$0xf0] %v231
    %234 = vst [vmem:[#allocation5 + $0x8] sm:$0xf0] %v232
    // Predicated region
    $region18: #{tpu_custom_call.1} parent=1 // pred_check
      _
    $region19: #{tpu_custom_call.1} parent=1 // pred_check_branch
      %236 = sbr.rel (0) target = $region21
    $region20: #{tpu_custom_call.1} parent=1 // pred_region
      %s238 = ssub.s32 256, 256
      %239 = vsyncadd [#allocation4], %s238
      %s241 = sshll.u32 [#allocation5], 4
      %s242 = int_to_ptr.vmem [resolvable:$true] %s241
      %244 = dma.vmem_to_hbm [thread:$0]  %s242, 256, %s3, [#allocation4]
    $region21: #{tpu_custom_call.1} parent=1 // pred_fallthru
      _
    // Predicated region
    $region22: #{tpu_custom_call.1} parent=1 // pred_check
      _
    $region23: #{tpu_custom_call.1} parent=1 // pred_check_branch
      %246 = sbr.rel (0) target = $region25
    $region24: #{tpu_custom_call.1} parent=1 // pred_region
      %247 = dma.done [#allocation4], 256
    $region25: #{tpu_custom_call.1} parent=1 // pred_fallthru
      _
    %248 = vsyncpa [#allocation3], 1
    %249 = vsyncpa [#allocation4], 1

</llo_original>
